<compile_context>
chip_gen: v7x
topology: tpu7x:2x2x1
jax: 0.10.0
libtpu: 0.0.40
codegen_flags: <defaults>
</compile_context>

<pallas_src>
import math

import jax
import jax.numpy as jnp
from jax.experimental import pallas as pl
from jax.experimental.pallas import tpu as pltpu

arm_dimension = 2
hiddenSize = 3
outputSize = 1

_LANES = 128
_SQRT_HIDDEN = math.sqrt(float(hiddenSize))


def _neural_ucb_kernel(w1_ref, w2s_ref, x_ref, o_ref):
    # w1_ref : (hiddenSize, arm_dimension) f32 in SMEM   (scalar reads)
    # w2s_ref: (outputSize, hiddenSize)    f32 in SMEM, pre-scaled by sqrt(hiddenSize)
    # x_ref  : (arm_dimension, TR, 128)    f32 in VMEM, dense batch slab
    # o_ref  : (outputSize,    TR, 128)    f32 in VMEM
    cols = [x_ref[k] for k in range(arm_dimension)]        # each (TR, 128), full vregs

    # Hidden layer + ReLU, fully unrolled (hiddenSize=3, arm_dimension=2): pure VPU.
    hs = []
    for j in range(hiddenSize):
        z = w1_ref[j, 0] * cols[0]
        for k in range(1, arm_dimension):
            z = z + w1_ref[j, k] * cols[k]
        hs.append(jnp.maximum(z, 0.0))

    # Output layer; sqrt(hiddenSize) already folded into w2s.
    for r in range(outputSize):
        acc = w2s_ref[r, 0] * hs[0]
        for j in range(1, hiddenSize):
            acc = acc + w2s_ref[r, j] * hs[j]
        o_ref[r] = acc


def prepare_params(w1, w2):
    """One-time constant fold: scale W2 by sqrt(hiddenSize)."""
    w1 = jnp.asarray(w1, jnp.float32)
    w2_scaled = jnp.float32(_SQRT_HIDDEN) * jnp.asarray(w2, jnp.float32)
    return w1, w2_scaled


def _choose_row_tile(rows, block_rows):
    """Pick the row tile: multiple of 8 (or full extent if rows <= 8)."""
    block_rows = max(8, min(int(block_rows), 8192))   # <= 4 MiB/input block
    block_rows = (block_rows // 8) * 8
    if rows <= 8:
        return max(rows, 1)                            # full extent, allowed by Mosaic
    tr = min(block_rows, rows)
    if rows >= 16:
        # Keep >= 2 grid steps so v7x can shard the axis over its 2 TensorCores.
        tr = min(tr, pl.cdiv(rows, 2))
    return max(8, (tr // 8) * 8)


def neural_ucb_forward(x, w1, w2_scaled, block_rows=4096):
    """NeuralUCBModel forward.  x: (batch, arm_dimension) -> (batch, outputSize)."""
    batch = x.shape[0]
    assert x.shape[1] == arm_dimension

    rows = pl.cdiv(batch, _LANES)
    tr = _choose_row_tile(rows, block_rows)
    rows_padded = pl.cdiv(rows, tr) * tr               # every block full -> no ragged edge
    total = rows_padded * _LANES
    grid = (rows_padded // tr,)

    # Single fused layout pass: X (batch, d) -> dense lane slab (d, rows_padded, 128).
    # Padded columns compute garbage-free zeros and are sliced off below.
    x_t = jnp.transpose(x.astype(jnp.float32))          # (arm_dimension, batch)
    if total != batch:
        x_t = jnp.pad(x_t, ((0, 0), (0, total - batch)))
    x_slab = x_t.reshape(arm_dimension, rows_padded, _LANES)

    flops = total * (hiddenSize * 2 * arm_dimension + 2 * hiddenSize * outputSize)
    bytes_accessed = (total * (arm_dimension + outputSize)
                      + hiddenSize * arm_dimension + outputSize * hiddenSize) * 4

    out = pl.pallas_call(
        _neural_ucb_kernel,
        out_shape=jax.ShapeDtypeStruct((outputSize, rows_padded, _LANES), jnp.float32),
        grid_spec=pltpu.PrefetchScalarGridSpec(
            num_scalar_prefetch=0,
            grid=grid,
            in_specs=[
                pl.BlockSpec(memory_space=pltpu.MemorySpace.SMEM),   # W1 (whole)
                pl.BlockSpec(memory_space=pltpu.MemorySpace.SMEM),   # sqrt(h)*W2 (whole)
                pl.BlockSpec((arm_dimension, tr, _LANES), lambda i: (0, i, 0)),
            ],
            out_specs=pl.BlockSpec((outputSize, tr, _LANES), lambda i: (0, i, 0)),
        ),
        compiler_params=pltpu.CompilerParams(
            dimension_semantics=("parallel",),
            # MB-scale blocks: explicitly raise past v5e's 16 MiB default scoped VMEM,
            # while staying far under v7x's 64 MiB physical VMEM.
            vmem_limit_bytes=32 * 1024 * 1024,
        ),
        cost_estimate=pl.CostEstimate(
            flops=flops, transcendentals=0, bytes_accessed=bytes_accessed),
    )(w1, w2_scaled, x_slab)

    # Back to the PyTorch (batch, outputSize) layout; drop batch padding.
    return jnp.transpose(out.reshape(outputSize, total)[:, :batch])


if __name__ == "__main__":
    key = jax.random.PRNGKey(0)
    kx, k1, k2, kx2 = jax.random.split(key, 4)

    # Mimic nn.Linear default init: U(-1/sqrt(fan_in), 1/sqrt(fan_in)).
    b1 = 1.0 / math.sqrt(arm_dimension)
    b2 = 1.0 / math.sqrt(hiddenSize)
    w1 = jax.random.uniform(k1, (hiddenSize, arm_dimension), jnp.float32, -b1, b1)
    w2 = jax.random.uniform(k2, (outputSize, hiddenSize), jnp.float32, -b2, b2)
    w1_p, w2_p = prepare_params(w1, w2)

    def reference(xv):
        # Pure-JAX reference (matches the PyTorch module forward).
        return jnp.float32(_SQRT_HIDDEN) * (jnp.maximum(xv @ w1.T, 0.0) @ w2.T)

    # Small case typical of the bandit module: batch=8 arms of dimension 2.
    x_small = jax.random.normal(kx, (8, arm_dimension), jnp.float32)
    out_small = jax.block_until_ready(neural_ucb_forward(x_small, w1_p, w2_p))
    assert out_small.shape == (8, outputSize)
    assert jnp.allclose(out_small, reference(x_small), atol=1e-5, rtol=1e-5), "small mismatch"

    # Larger, non-multiple-of-128 batch: exercises multi-step grid + batch padding.
    x_big = jax.random.normal(kx2, (1300, arm_dimension), jnp.float32)
    out_big = jax.block_until_ready(neural_ucb_forward(x_big, w1_p, w2_p))
    assert out_big.shape == (1300, outputSize)
    assert jnp.allclose(out_big, reference(x_big), atol=1e-5, rtol=1e-5), "big mismatch"

    print("KERNEL_OK")
</pallas_src>

<mosaic_0001>
module attributes {stable_mosaic.version = 11 : i64} {
  func.func @_neural_ucb_kernel(%arg0: i32, %arg1: memref<3x2xf32, #tpu.memory_space<smem>>, %arg2: memref<1x3xf32, #tpu.memory_space<smem>>, %arg3: memref<2x1x128xf32, #tpu.memory_space<vmem>>, %arg4: memref<1x1x128xf32, #tpu.memory_space<vmem>>) attributes {dimension_semantics = [#tpu.dimension_semantics<parallel>], iteration_bounds = array<i64: 1>, scalar_prefetch = 0 : i64, scratch_operands = 0 : i64, tpu.core_type = #tpu.core_type<tc>, window_params = [{transform_indices = @transform_0, window_bounds = array<i64: 3, 2>}, {transform_indices = @transform_1, window_bounds = array<i64: 1, 3>}, {transform_indices = @transform_2, window_bounds = array<i64: 2, 1, 128>}, {transform_indices = @transform_3, window_bounds = array<i64: 1, 1, 128>}]} {
    %c0 = arith.constant 0 : index
    %c0_0 = arith.constant 0 : index
    %c0_1 = arith.constant 0 : index
    %0 = vector.load %arg3[%c0, %c0_0, %c0_1] : memref<2x1x128xf32, #tpu.memory_space<vmem>>, vector<1x1x128xf32>
    %1 = vector.shape_cast %0 : vector<1x1x128xf32> to vector<1x128xf32>
    %c1 = arith.constant 1 : index
    %c0_2 = arith.constant 0 : index
    %c0_3 = arith.constant 0 : index
    %2 = vector.load %arg3[%c1, %c0_2, %c0_3] : memref<2x1x128xf32, #tpu.memory_space<vmem>>, vector<1x1x128xf32>
    %3 = vector.shape_cast %2 : vector<1x1x128xf32> to vector<1x128xf32>
    %c0_4 = arith.constant 0 : index
    %c0_5 = arith.constant 0 : index
    %4 = memref.load %arg1[%c0_4, %c0_5] : memref<3x2xf32, #tpu.memory_space<smem>>
    %5 = vector.broadcast %4 : f32 to vector<1x128xf32>
    %6 = arith.mulf %5, %1 : vector<1x128xf32>
    %c0_6 = arith.constant 0 : index
    %c1_7 = arith.constant 1 : index
    %7 = memref.load %arg1[%c0_6, %c1_7] : memref<3x2xf32, #tpu.memory_space<smem>>
    %8 = vector.broadcast %7 : f32 to vector<1x128xf32>
    %9 = arith.mulf %8, %3 : vector<1x128xf32>
    %10 = arith.addf %6, %9 : vector<1x128xf32>
    %cst = arith.constant 0.000000e+00 : f32
    %11 = vector.broadcast %cst : f32 to vector<1x128xf32>
    %12 = arith.maximumf %10, %11 : vector<1x128xf32>
    %c1_8 = arith.constant 1 : index
    %c0_9 = arith.constant 0 : index
    %13 = memref.load %arg1[%c1_8, %c0_9] : memref<3x2xf32, #tpu.memory_space<smem>>
    %14 = vector.broadcast %13 : f32 to vector<1x128xf32>
    %15 = arith.mulf %14, %1 : vector<1x128xf32>
    %c1_10 = arith.constant 1 : index
    %c1_11 = arith.constant 1 : index
    %16 = memref.load %arg1[%c1_10, %c1_11] : memref<3x2xf32, #tpu.memory_space<smem>>
    %17 = vector.broadcast %16 : f32 to vector<1x128xf32>
    %18 = arith.mulf %17, %3 : vector<1x128xf32>
    %19 = arith.addf %15, %18 : vector<1x128xf32>
    %cst_12 = arith.constant 0.000000e+00 : f32
    %20 = vector.broadcast %cst_12 : f32 to vector<1x128xf32>
    %21 = arith.maximumf %19, %20 : vector<1x128xf32>
    %c2 = arith.constant 2 : index
    %c0_13 = arith.constant 0 : index
    %22 = memref.load %arg1[%c2, %c0_13] : memref<3x2xf32, #tpu.memory_space<smem>>
    %23 = vector.broadcast %22 : f32 to vector<1x128xf32>
    %24 = arith.mulf %23, %1 : vector<1x128xf32>
    %c2_14 = arith.constant 2 : index
    %c1_15 = arith.constant 1 : index
    %25 = memref.load %arg1[%c2_14, %c1_15] : memref<3x2xf32, #tpu.memory_space<smem>>
    %26 = vector.broadcast %25 : f32 to vector<1x128xf32>
    %27 = arith.mulf %26, %3 : vector<1x128xf32>
    %28 = arith.addf %24, %27 : vector<1x128xf32>
    %cst_16 = arith.constant 0.000000e+00 : f32
    %29 = vector.broadcast %cst_16 : f32 to vector<1x128xf32>
    %30 = arith.maximumf %28, %29 : vector<1x128xf32>
    %c0_17 = arith.constant 0 : index
    %c0_18 = arith.constant 0 : index
    %31 = memref.load %arg2[%c0_17, %c0_18] : memref<1x3xf32, #tpu.memory_space<smem>>
    %32 = vector.broadcast %31 : f32 to vector<1x128xf32>
    %33 = arith.mulf %32, %12 : vector<1x128xf32>
    %c0_19 = arith.constant 0 : index
    %c1_20 = arith.constant 1 : index
    %34 = memref.load %arg2[%c0_19, %c1_20] : memref<1x3xf32, #tpu.memory_space<smem>>
    %35 = vector.broadcast %34 : f32 to vector<1x128xf32>
    %36 = arith.mulf %35, %21 : vector<1x128xf32>
    %37 = arith.addf %33, %36 : vector<1x128xf32>
    %c0_21 = arith.constant 0 : index
    %c2_22 = arith.constant 2 : index
    %38 = memref.load %arg2[%c0_21, %c2_22] : memref<1x3xf32, #tpu.memory_space<smem>>
    %39 = vector.broadcast %38 : f32 to vector<1x128xf32>
    %40 = arith.mulf %39, %30 : vector<1x128xf32>
    %41 = arith.addf %37, %40 : vector<1x128xf32>
    %c0_23 = arith.constant 0 : index
    %c0_24 = arith.constant 0 : index
    %c0_25 = arith.constant 0 : index
    %42 = vector.load %arg4[%c0_23, %c0_24, %c0_25] : memref<1x1x128xf32, #tpu.memory_space<vmem>>, vector<1x1x128xf32>
    %43 = vector.shape_cast %42 : vector<1x1x128xf32> to vector<1x128xf32>
    %44 = vector.shape_cast %41 : vector<1x128xf32> to vector<1x1x128xf32>
    tpu.vector_store %arg4[%c0_23, %c0_24, %c0_25], %44 {strides = array<i32>} : memref<1x1x128xf32, #tpu.memory_space<vmem>>, vector<1x1x128xf32>,
    return
  }
  func.func @transform_0(%arg0: i32) -> (i32, i32) {
    %c0_i32 = arith.constant 0 : i32
    %c0_i32_0 = arith.constant 0 : i32
    %c0_i32_1 = arith.constant 0 : i32
    return %c0_i32, %c0_i32_0 : i32, i32
  }
  func.func @transform_1(%arg0: i32) -> (i32, i32) {
    %c0_i32 = arith.constant 0 : i32
    %c0_i32_0 = arith.constant 0 : i32
    %c0_i32_1 = arith.constant 0 : i32
    return %c0_i32, %c0_i32_0 : i32, i32
  }
  func.func @transform_2(%arg0: i32) -> (i32, i32, i32) {
    %c0_i32 = arith.constant 0 : i32
    %c0_i32_0 = arith.constant 0 : i32
    %c0_i32_1 = arith.constant 0 : i32
    return %c0_i32, %arg0, %c0_i32_0 : i32, i32, i32
  }
  func.func @transform_3(%arg0: i32) -> (i32, i32, i32) {
    %c0_i32 = arith.constant 0 : i32
    %c0_i32_0 = arith.constant 0 : i32
    %c0_i32_1 = arith.constant 0 : i32
    return %c0_i32, %arg0, %c0_i32_0 : i32, i32, i32
  }
}

</mosaic_0001>

<llo_original>
// kernel: tpu_custom_call.1
$region0: #{tpu_custom_call.1}
  #allocation0 [shape = 'u32[]', space=smem, size = 0x4, offset = 0x4, fixed_abs, tag = 'smem constant byte address 0x4 - core index']
  #allocation1 [shape = 'u32[144,128]{1,0:T(1,128)}', space=vmem, size = 0x12000, scoped, tag = 'internal scratch']
  %s0 = inlined_call_operand.vmem [shape: f32[3,2], index: 0, kind: input, shape index: {}]
  %s1 = inlined_call_operand.vmem [shape: f32[1,3], index: 1, kind: input, shape index: {}]
  %s2 = inlined_call_operand.vmem [shape: f32[2,1,128], index: 2, kind: input, shape index: {}]
  %s3 = inlined_call_operand.hbm [shape: f32[1,1,128], index: 3, kind: output, shape index: {}]
  %s4 = sld [smem:[#allocation0]]
  $region30: #{tpu_custom_call.1} parent=0
    _
  %s6 = ssub.s32 1, %s4
  %s7 = scalar_select 0, %s6, %s4
  $region1: #{tpu_custom_call.1} parent=0
    #allocation2 [shape = 'u8[2048]{0}', space=smem, size = 0x800, scoped, tag = 'input window, operand 0, single buffered']
    #allocation3 [shape = 's32[1]{0}', space=sflag, size = 0x4, scoped, tag = 'scoped memory for tpu_custom_call.1']
    #allocation4 [shape = 's32[1]{0}', space=sflag, size = 0x4, scoped, tag = 'scoped memory for tpu_custom_call.1']
    #allocation5 [shape = 'u8[512]{0}', space=smem, size = 0x200, scoped, tag = 'input window, operand 1, single buffered']
    #allocation6 [shape = 's32[1]{0}', space=sflag, size = 0x4, scoped, tag = 'scoped memory for tpu_custom_call.1']
    #allocation7 [shape = 'u8[512]{0}', space=vmem, size = 0x400, scoped, tag = 'output window, operand 0, single buffered']
    %8 = vsyncpa [#allocation4], 0
    %9 = vsyncpa [#allocation6], 0
    %10 = vsyncpa [#allocation3], 0
    // Predicated region
    $region2: #{tpu_custom_call.1} parent=1 // pred_check
      _
    $region3: #{tpu_custom_call.1} parent=1 // pred_check_branch
      %12 = sbr.rel (0) target = $region5
    $region4: #{tpu_custom_call.1} parent=1 // pred_region
      %s14 = ssub.s32 64, 64
      %15 = vsyncadd [#allocation4], %s14
      %s17 = sshll.u32 %s0, 4
      %s18 = int_to_ptr.vmem [resolvable:$true] %s17
      %20 = dma.vmem_to_smem %s18, 64, [#allocation2], [#allocation4]
    $region5: #{tpu_custom_call.1} parent=1 // pred_fallthru
      _
    // Predicated region
    $region6: #{tpu_custom_call.1} parent=1 // pred_check
      _
    $region7: #{tpu_custom_call.1} parent=1 // pred_check_branch
      %22 = sbr.rel (0) target = $region9
    $region8: #{tpu_custom_call.1} parent=1 // pred_region
      %s24 = ssub.s32 16, 16
      %25 = vsyncadd [#allocation6], %s24
      %s27 = sshll.u32 %s1, 4
      %s28 = int_to_ptr.vmem [resolvable:$true] %s27
      %30 = dma.vmem_to_smem %s28, 16, [#allocation5], [#allocation6]
    $region9: #{tpu_custom_call.1} parent=1 // pred_fallthru
      _
    // Predicated region
    $region10: #{tpu_custom_call.1} parent=1 // pred_check
      _
    $region11: #{tpu_custom_call.1} parent=1 // pred_check_branch
      %32 = sbr.rel (0) target = $region13
    $region12: #{tpu_custom_call.1} parent=1 // pred_region
      _
    $region13: #{tpu_custom_call.1} parent=1 // pred_fallthru
      _
    // Predicated region
    $region14: #{tpu_custom_call.1} parent=1 // pred_check
      _
    $region15: #{tpu_custom_call.1} parent=1 // pred_check_branch
      %34 = sbr.rel (0) target = $region17
    $region16: #{tpu_custom_call.1} parent=1 // pred_region
      %35 = dma.done [#allocation4], 64
    $region17: #{tpu_custom_call.1} parent=1 // pred_fallthru
      _
    // Predicated region
    $region18: #{tpu_custom_call.1} parent=1 // pred_check
      _
    $region19: #{tpu_custom_call.1} parent=1 // pred_check_branch
      %37 = sbr.rel (0) target = $region21
    $region20: #{tpu_custom_call.1} parent=1 // pred_region
      %38 = dma.done [#allocation6], 16
    $region21: #{tpu_custom_call.1} parent=1 // pred_fallthru
      _
    %39 = sfence
    %v40 = vld [vmem:[%s2] sm:$0x1]
    %s41 = scalar_lea.vmem %s2, 1
    %v42 = vld [vmem:[%s41] sm:$0x1]
    %s43 = sld [smem:[#allocation2]]
    %v44 = vstv %s43
    %v45 = vmul.f32 %v44, %v40
    %s46 = sld [smem:[#allocation2 + $0x1]]
    %v47 = vstv %s46
    %v48 = vmul.f32 %v47, %v42
    %v49 = vadd.f32 %v45, %v48
    %v50 = vmax.f32 %v49, 0.0
    %s51 = sld [smem:[#allocation2 + $0x80]]
    %v52 = vstv %s51
    %v53 = vmul.f32 %v52, %v40
    %s54 = sld [smem:[#allocation2 + $0x81]]
    %v55 = vstv %s54
    %v56 = vmul.f32 %v55, %v42
    %v57 = vadd.f32 %v53, %v56
    %v58 = vmax.f32 %v57, 0.0
    %s59 = sld [smem:[#allocation2 + $0x100]]
    %v60 = vstv %s59
    %v61 = vmul.f32 %v60, %v40
    %s62 = sld [smem:[#allocation2 + $0x101]]
    %v63 = vstv %s62
    %v64 = vmul.f32 %v63, %v42
    %v65 = vadd.f32 %v61, %v64
    %v66 = vmax.f32 %v65, 0.0
    %s67 = sld [smem:[#allocation5]]
    %v68 = vstv %s67
    %v69 = vmul.f32 %v68, %v50
    %s70 = sld [smem:[#allocation5 + $0x1]]
    %v71 = vstv %s70
    %v72 = vmul.f32 %v71, %v58
    %v73 = vadd.f32 %v69, %v72
    %s74 = sld [smem:[#allocation5 + $0x2]]
    %v75 = vstv %s74
    %v76 = vmul.f32 %v75, %v66
    %v77 = vadd.f32 %v73, %v76
    %78 = vst [vmem:[#allocation7] sm:$0x1] %v77
    // Predicated region
    $region22: #{tpu_custom_call.1} parent=1 // pred_check
      _
    $region23: #{tpu_custom_call.1} parent=1 // pred_check_branch
      %80 = sbr.rel (0) target = $region25
    $region24: #{tpu_custom_call.1} parent=1 // pred_region
      %s82 = ssub.s32 16, 16
      %83 = vsyncadd [#allocation3], %s82
      %s85 = sshll.u32 [#allocation7], 4
      %s86 = int_to_ptr.vmem [resolvable:$true] %s85
      %88 = dma.vmem_to_hbm [thread:$0]  %s86, 16, %s3, [#allocation3]
    $region25: #{tpu_custom_call.1} parent=1 // pred_fallthru
      _
    // Predicated region
    $region26: #{tpu_custom_call.1} parent=1 // pred_check
      _
    $region27: #{tpu_custom_call.1} parent=1 // pred_check_branch
      %90 = sbr.rel (0) target = $region29
    $region28: #{tpu_custom_call.1} parent=1 // pred_region
      %91 = dma.done [#allocation3], 16
    $region29: #{tpu_custom_call.1} parent=1 // pred_fallthru
      _
    %92 = vsyncpa [#allocation3], 1
    %93 = vsyncpa [#allocation4], 1
    %94 = vsyncpa [#allocation6], 1

</llo_original>
